<compile_context>
chip_gen: v7x
topology: tpu7x:2x2x1
jax: 0.10.0
libtpu: 0.0.40
codegen_flags: <defaults>
</compile_context>

<pallas_src>
import jax
import jax.numpy as jnp
from jax.experimental import pallas as pl
from jax.experimental.pallas import tpu as pltpu


def _round_up(v: int, m: int) -> int:
    return ((v + m - 1) // m) * m


def _cdiv(a: int, b: int) -> int:
    return -(-a // b)


def _sublane_multiple(dtype) -> int:
    itemsize = jnp.dtype(dtype).itemsize
    if itemsize >= 4:
        return 8
    if itemsize == 2:
        return 16
    return 32


def _tpu_caps():
    """Best-effort (tensorcores_per_device, vmem_bytes_per_core)."""
    cores = 1
    vmem = 128 * 1024 * 1024
    try:
        info = pltpu.get_tpu_info()
        vmem = int(getattr(info, "vmem_capacity_bytes", vmem)) or vmem
        found = False
        for attr in ("num_cores", "tensorcores_per_chip", "num_tensorcores",
                     "core_count"):
            v = getattr(info, attr, None)
            if v:
                cores = int(v)
                found = True
                break
        if not found and vmem <= 64 * 1024 * 1024:
            # v7x: 64 MiB VMEM per TC, 2 TCs per chip.
            cores = 2
    except Exception:
        pass
    return cores, vmem


def _trim_kernel(x_ref, o_ref):
    # x_ref: (bp, rows_in, cols_in) VMEM tile; o_ref: (bp, rows_out, cols_out).
    rows = o_ref.shape[1]
    cols = o_ref.shape[2]
    o_ref[...] = x_ref[:, :rows, :cols]


def trim(x: jax.Array, shape: int, *, force_pallas: bool = False,
         _step_budget_override: int | None = None) -> jax.Array:
    """Pallas equivalent of Trim(shape)(x) for NCHW input x."""
    n, c, h, w = x.shape
    assert 0 < shape <= h and shape <= w, "trim size must not exceed spatial dims"

    itemsize = jnp.dtype(x.dtype).itemsize
    out_bytes_total = n * c * shape * shape * itemsize

    # Tiny tensors: a fused XLA slice beats any kernel launch by >10x.
    if not force_pallas and out_bytes_total < 256 * 1024:
        return x[:, :, :shape, :shape]

    sub = _sublane_multiple(x.dtype)
    p = n * c
    xp = x.reshape(p, h, w)

    # Trim BOTH rows and columns at the BlockSpec level (only DMA what we keep,
    # rounded up to the dtype sublane multiple / 128-lane tile).
    rows_in = h if _round_up(shape, sub) >= h else _round_up(shape, sub)
    cols_in = w if _round_up(shape, 128) >= w else _round_up(shape, 128)

    cores, vmem_cap = _tpu_caps()

    # Per-grid-step (single-buffer) VMEM budget; Pallas double-buffers both
    # input and output blocks, so the real footprint is ~2x this.
    if _step_budget_override is not None:
        step_budget = _step_budget_override
    elif vmem_cap >= 96 * 1024 * 1024:          # v5e / v6e: 128 MiB VMEM
        step_budget = 14 * 1024 * 1024
    else:                                       # v7x: 64 MiB VMEM per TC
        step_budget = 7 * 1024 * 1024
    vmem_limit = min(vmem_cap, max(32 * 1024 * 1024,
                                   2 * step_budget + 8 * 1024 * 1024))

    # Padded VMEM footprint per plane (what actually lives in VMEM).
    in_plane_pad = _round_up(rows_in, sub) * _round_up(cols_in, 128) * itemsize
    out_plane_pad = _round_up(shape, sub) * _round_up(shape, 128) * itemsize
    per_plane_pad = in_plane_pad + out_plane_pad

    # Actual HBM traffic (for the scheduler hint).
    total_in_bytes = p * rows_in * cols_in * itemsize
    total_out_bytes = p * shape * shape * itemsize

    if per_plane_pad <= step_budget:
        # Pack as many (row+column)-trimmed planes as fit per grid step.
        bp = max(1, min(p, step_budget // per_plane_pad))
        # Multi-TensorCore parts (v7x): split the mem-bound copy into an even,
        # balanced number of steps so both cores get equal plane counts.
        if cores >= 2 and p >= 2 and total_in_bytes >= 4 * 1024 * 1024:
            steps = max(2, 2 * _cdiv(p, 2 * bp))
            bp = _cdiv(p, steps)
        grid = (_cdiv(p, bp),)
        in_specs = [pl.BlockSpec((bp, rows_in, cols_in), lambda i: (i, 0, 0))]
        out_specs = pl.BlockSpec((bp, shape, shape), lambda i: (i, 0, 0))
        dim_sem = ("parallel",)
    else:
        # A single plane blows the budget: tile rows in sublane-aligned chunks
        # (columns are still trimmed to cols_in at the BlockSpec).
        in_row_pad = _round_up(cols_in, 128) * itemsize
        out_row_pad = _round_up(shape, 128) * itemsize
        tr = (step_budget // (in_row_pad + out_row_pad)) // sub * sub
        tr = max(sub, min(tr, _round_up(shape, sub)))
        grid = (p, _cdiv(shape, tr))
        in_specs = [pl.BlockSpec((1, tr, cols_in), lambda i, r: (i, r, 0))]
        out_specs = pl.BlockSpec((1, tr, shape), lambda i, r: (i, r, 0))
        dim_sem = ("parallel", "parallel")

    out = pl.pallas_call(
        _trim_kernel,
        out_shape=jax.ShapeDtypeStruct((p, shape, shape), x.dtype),
        grid=grid,
        in_specs=in_specs,
        out_specs=out_specs,
        compiler_params=pltpu.CompilerParams(
            dimension_semantics=dim_sem,
            vmem_limit_bytes=vmem_limit,
        ),
        cost_estimate=pl.CostEstimate(
            flops=0,
            transcendentals=0,
            bytes_accessed=total_in_bytes + total_out_bytes,
        ),
    )(xp)

    return out.reshape(n, c, shape, shape)


if __name__ == "__main__":
    key = jax.random.PRNGKey(0)

    # Demo shapes consistent with a VAE decoder output, NCHW.
    N, C, H, W = 2, 4, 16, 16
    TRIM = 12  # Trim(shape=12): keep top-left 12x12 spatial region

    x = jax.random.normal(key, (N, C, H, W), dtype=jnp.float32)
    ref = x[:, :, :TRIM, :TRIM]

    # 1) Pallas packed-planes path (forced; the auto path would take the
    #    tiny-tensor XLA-slice fallback for an 8 KB tensor).
    y = jax.block_until_ready(trim(x, TRIM, force_pallas=True))
    assert y.shape == (N, C, TRIM, TRIM), y.shape
    assert y.dtype == x.dtype
    assert jnp.array_equal(y, ref), "mismatch vs reference (packed-planes path)"

    # 2) Tiny-tensor fallback path (auto dispatch -> XLA slice).
    y_fb = jax.block_until_ready(trim(x, TRIM))
    assert jnp.array_equal(y_fb, ref), "mismatch vs reference (fallback path)"

    # 3) BlockSpec-level row AND column trim (rows_in < H, cols_in < W).
    x2 = jax.random.normal(jax.random.PRNGKey(1), (1, 2, 64, 256), jnp.float32)
    y2 = jax.block_until_ready(trim(x2, 40, force_pallas=True))
    assert jnp.array_equal(y2, x2[:, :, :40, :40]), "mismatch (row+col trim path)"

    # 4) bf16 path (16-row sublane multiple).
    x3 = jax.random.normal(jax.random.PRNGKey(2), (1, 2, 32, 160), jnp.bfloat16)
    y3 = jax.block_until_ready(trim(x3, 17, force_pallas=True))
    assert jnp.array_equal(y3, x3[:, :, :17, :17]), "mismatch (bf16 path)"

    # 5) Row-tiled branch, exercised via a tiny per-step budget override.
    x4 = jax.random.normal(jax.random.PRNGKey(3), (1, 1, 64, 256), jnp.float32)
    y4 = jax.block_until_ready(
        trim(x4, 48, force_pallas=True, _step_budget_override=16 * 1024))
    assert jnp.array_equal(y4, x4[:, :, :48, :48]), "mismatch (row-tiled path)"

    print("KERNEL_OK")
</pallas_src>

<mosaic_0001>
module attributes {stable_mosaic.version = 11 : i64} {
  func.func @_trim_kernel(%arg0: i32, %arg1: memref<8x16x16xf32, #tpu.memory_space<vmem>>, %arg2: memref<8x12x12xf32, #tpu.memory_space<vmem>>) attributes {dimension_semantics = [#tpu.dimension_semantics<parallel>], iteration_bounds = array<i64: 1>, scalar_prefetch = 0 : i64, scratch_operands = 0 : i64, tpu.core_type = #tpu.core_type<tc>, window_params = [{transform_indices = @transform_0, window_bounds = array<i64: 8, 16, 16>}, {transform_indices = @transform_1, window_bounds = array<i64: 8, 12, 12>}]} {
    %c0 = arith.constant 0 : index
    %c0_0 = arith.constant 0 : index
    %c0_1 = arith.constant 0 : index
    %0 = vector.load %arg1[%c0, %c0_0, %c0_1] : memref<8x16x16xf32, #tpu.memory_space<vmem>>, vector<8x12x12xf32>
    %c0_2 = arith.constant 0 : index
    %c0_3 = arith.constant 0 : index
    %c0_4 = arith.constant 0 : index
    %1 = vector.load %arg2[%c0_2, %c0_3, %c0_4] : memref<8x12x12xf32, #tpu.memory_space<vmem>>, vector<8x12x12xf32>
    tpu.vector_store %arg2[%c0_2, %c0_3, %c0_4], %0 {strides = array<i32>} : memref<8x12x12xf32, #tpu.memory_space<vmem>>, vector<8x12x12xf32>,
    return
  }
  func.func @transform_0(%arg0: i32) -> (i32, i32, i32) {
    %c0_i32 = arith.constant 0 : i32
    %c0_i32_0 = arith.constant 0 : i32
    %c0_i32_1 = arith.constant 0 : i32
    return %arg0, %c0_i32, %c0_i32_0 : i32, i32, i32
  }
  func.func @transform_1(%arg0: i32) -> (i32, i32, i32) {
    %c0_i32 = arith.constant 0 : i32
    %c0_i32_0 = arith.constant 0 : i32
    %c0_i32_1 = arith.constant 0 : i32
    return %arg0, %c0_i32, %c0_i32_0 : i32, i32, i32
  }
}

</mosaic_0001>

<llo_original>
// kernel: tpu_custom_call.1
$region0: #{tpu_custom_call.1}
  #allocation0 [shape = 'u32[]', space=smem, size = 0x4, offset = 0x4, fixed_abs, tag = 'smem constant byte address 0x4 - core index']
  #allocation1 [shape = 'u32[144,128]{1,0:T(1,128)}', space=vmem, size = 0x12000, scoped, tag = 'internal scratch']
  %s0 = inlined_call_operand.hbm [shape: f32[8,16,16], index: 0, kind: input, shape index: {}]
  %s1 = inlined_call_operand.vmem [shape: f32[8,12,12], index: 1, kind: output, shape index: {}]
  %s2 = sld [smem:[#allocation0]]
  $region18: #{tpu_custom_call.1} parent=0
    _
  %s4 = ssub.s32 1, %s2
  %s5 = scalar_select 0, %s4, %s2
  $region1: #{tpu_custom_call.1} parent=0
    #allocation2 [shape = 'u8[65536]{0}', space=vmem, size = 0x10000, scoped, tag = 'input window, operand 0, single buffered']
    #allocation3 [shape = 's32[1]{0}', space=sflag, size = 0x4, scoped, tag = 'scoped memory for tpu_custom_call.1']
    %6 = vsyncpa [#allocation3], 0
    // Predicated region
    $region2: #{tpu_custom_call.1} parent=1 // pred_check
      _
    $region3: #{tpu_custom_call.1} parent=1 // pred_check_branch
      %8 = sbr.rel (0) target = $region5
    $region4: #{tpu_custom_call.1} parent=1 // pred_region
      %s10 = ssub.s32 2048, 2048
      %11 = vsyncadd [#allocation3], %s10
      %s12 = sshll.u32 [#allocation2], 4
      %s13 = int_to_ptr.vmem [resolvable:$true] %s12
      %18 = dma.hbm_to_vmem [thread:$0]  %s0, 2048, %s13, [#allocation3], 128, 128, 8
    $region5: #{tpu_custom_call.1} parent=1 // pred_fallthru
      _
    // Predicated region
    $region6: #{tpu_custom_call.1} parent=1 // pred_check
      _
    $region7: #{tpu_custom_call.1} parent=1 // pred_check_branch
      %20 = sbr.rel (0) target = $region9
    $region8: #{tpu_custom_call.1} parent=1 // pred_region
      %21 = dma.done [#allocation3], 2048
    $region9: #{tpu_custom_call.1} parent=1 // pred_fallthru
      _
    %v22 = vld [vmem:[#allocation2] sm:$0xff]
    %v23 = vld [vmem:[#allocation2 + $0x8] sm:$0xf]
    %v24 = vld [vmem:[#allocation2 + $0x10] sm:$0xff]
    %v25 = vld [vmem:[#allocation2 + $0x18] sm:$0xf]
    %v26 = vld [vmem:[#allocation2 + $0x20] sm:$0xff]
    %v27 = vld [vmem:[#allocation2 + $0x28] sm:$0xf]
    %v28 = vld [vmem:[#allocation2 + $0x30] sm:$0xff]
    %v29 = vld [vmem:[#allocation2 + $0x38] sm:$0xf]
    %v30 = vld [vmem:[#allocation2 + $0x40] sm:$0xff]
    %v31 = vld [vmem:[#allocation2 + $0x48] sm:$0xf]
    %v32 = vld [vmem:[#allocation2 + $0x50] sm:$0xff]
    %v33 = vld [vmem:[#allocation2 + $0x58] sm:$0xf]
    %v34 = vld [vmem:[#allocation2 + $0x60] sm:$0xff]
    %v35 = vld [vmem:[#allocation2 + $0x68] sm:$0xf]
    %v36 = vld [vmem:[#allocation2 + $0x70] sm:$0xff]
    %v37 = vld [vmem:[#allocation2 + $0x78] sm:$0xf]
    %vm38 = vcmask 97280
    %39 = vst.msk [vmem:[%s1] sm:$0xff] %vm38, %v22
    %vm40 = vcmask 93184
    %41 = vst.msk [vmem:[%s1 + $0x8] sm:$0xf] %vm40, %v23
    %42 = vst.msk [vmem:[%s1 + $0x10] sm:$0xff] %vm38, %v24
    %43 = vst.msk [vmem:[%s1 + $0x18] sm:$0xf] %vm40, %v25
    %44 = vst.msk [vmem:[%s1 + $0x20] sm:$0xff] %vm38, %v26
    %45 = vst.msk [vmem:[%s1 + $0x28] sm:$0xf] %vm40, %v27
    %46 = vst.msk [vmem:[%s1 + $0x30] sm:$0xff] %vm38, %v28
    %47 = vst.msk [vmem:[%s1 + $0x38] sm:$0xf] %vm40, %v29
    %48 = vst.msk [vmem:[%s1 + $0x40] sm:$0xff] %vm38, %v30
    %49 = vst.msk [vmem:[%s1 + $0x48] sm:$0xf] %vm40, %v31
    %50 = vst.msk [vmem:[%s1 + $0x50] sm:$0xff] %vm38, %v32
    %51 = vst.msk [vmem:[%s1 + $0x58] sm:$0xf] %vm40, %v33
    %52 = vst.msk [vmem:[%s1 + $0x60] sm:$0xff] %vm38, %v34
    %53 = vst.msk [vmem:[%s1 + $0x68] sm:$0xf] %vm40, %v35
    %54 = vst.msk [vmem:[%s1 + $0x70] sm:$0xff] %vm38, %v36
    %55 = vst.msk [vmem:[%s1 + $0x78] sm:$0xf] %vm40, %v37
    // Predicated region
    $region10: #{tpu_custom_call.1} parent=1 // pred_check
      _
    $region11: #{tpu_custom_call.1} parent=1 // pred_check_branch
      %57 = sbr.rel (0) target = $region13
    $region12: #{tpu_custom_call.1} parent=1 // pred_region
      _
    $region13: #{tpu_custom_call.1} parent=1 // pred_fallthru
      _
    // Predicated region
    $region14: #{tpu_custom_call.1} parent=1 // pred_check
      _
    $region15: #{tpu_custom_call.1} parent=1 // pred_check_branch
      %59 = sbr.rel (0) target = $region17
    $region16: #{tpu_custom_call.1} parent=1 // pred_region
      _
    $region17: #{tpu_custom_call.1} parent=1 // pred_fallthru
      _
    %60 = vsyncpa [#allocation3], 1

</llo_original>
